<compile_context>
chip_gen: v7x
topology: tpu7x:2x2x1
jax: 0.10.0
libtpu: 0.0.40
codegen_flags: <defaults>
</compile_context>

<pallas_src>
import functools

import jax
import jax.numpy as jnp
from jax.experimental import pallas as pl
from jax.experimental.pallas import tpu as pltpu


def _round_up(n, m):
    return ((n + m - 1) // m) * m


def _cdiv(a, b):
    return (a + b - 1) // b


def _binf2ipa_kernel(x_ref, m_ref, o_ref, *, matmul_dtype):
    # x_ref: (tm, F_p) f32 row tile, m_ref: (F_p, V) mapping (matmul_dtype),
    # o_ref: (tm, V) output tile.
    x = x_ref[...]

    # log(1 - sigmoid(x)) = -softplus(x); stable form.  Padded feature columns
    # were filled with a large negative value so their softplus is exactly 0.
    sp = jnp.maximum(x, 0.0) + jnp.log1p(jnp.exp(-jnp.abs(x)))
    row_bias = -jnp.sum(sp, axis=-1, keepdims=True)            # (tm, 1)

    # Single MXU matmul with f32 accumulation (M already in matmul_dtype).
    out = jnp.dot(
        x.astype(matmul_dtype),
        m_ref[...],
        preferred_element_type=jnp.float32,
    )
    o_ref[...] = (out + row_bias).astype(o_ref.dtype)


def binf2ipa_mapper(x, mapping, *, tm=None, matmul_dtype=jnp.bfloat16,
                    out_dtype=jnp.float32):
    """x: [B, T, F] binary-feature logits; mapping: [F, V] binf->IPA (0/1).

    Returns phone log-probabilities of shape [B, T, V] (out_dtype).
    matmul_dtype=jnp.float32 gives a bit-tighter matmul at ~2-3x MXU cost.
    """
    B, T, F = x.shape
    F2, V = mapping.shape
    assert F == F2, "mapping first dim must equal binary feature count"

    rows = B * T
    F_p = _round_up(F, 128)                      # lane-dense feature axis

    # Prepare inputs.  Pad the feature axis of x with a large negative value:
    # softplus(-1e4) == 0 exactly and the matched zero rows of M make the
    # matmul contribution exactly 0, so the result is unchanged.
    x2 = x.reshape(rows, F).astype(jnp.float32)
    if F_p != F:
        x2 = jnp.pad(x2, ((0, 0), (0, F_p - F)), constant_values=-1e4)
    m = mapping.astype(matmul_dtype)             # 0/1 -> exact in bf16
    if F_p != F:
        m = jnp.pad(m, ((0, F_p - F), (0, 0)))

    m_bytes = F_p * V * jnp.dtype(matmul_dtype).itemsize
    x_item = 4
    out_item = jnp.dtype(out_dtype).itemsize

    # Per-generation VMEM budget (v5e/v6e: 128 MiB, v7x: 64 MiB per core).
    try:
        vmem_cap = int(pltpu.get_tpu_info().vmem_capacity_bytes)
    except Exception:
        vmem_cap = 64 * 1024 * 1024
    vmem_budget = min(int(vmem_cap * 0.75), 100 * 1024 * 1024)

    # Row-tile size: double-buffered x and out tiles + (double-buffered) M.
    per_row = 2 * (x_item * F_p + out_item * V)
    usable = int(vmem_budget * 0.85) - 2 * m_bytes
    tm_fit = max(8, usable // per_row) if usable > 0 else 8
    if tm is None:
        tm = 4096                               # amortizes ~0.35 us/step overhead
    tm = min(tm, tm_fit)
    # Keep at least 2 row tiles so both v7x TensorCores get work.
    tm = min(tm, _round_up(_cdiv(rows, 2), 8))
    tm = max(8, (tm // 8) * 8)                  # sublane-aligned

    grid = (_cdiv(rows, tm),)                   # overhanging tile is masked

    out = pl.pallas_call(
        functools.partial(_binf2ipa_kernel, matmul_dtype=matmul_dtype),
        out_shape=jax.ShapeDtypeStruct((rows, V), out_dtype),
        grid_spec=pl.GridSpec(
            grid=grid,
            in_specs=[
                pl.BlockSpec((tm, F_p), lambda i: (i, 0)),   # row tile
                pl.BlockSpec((F_p, V), lambda i: (0, 0)),    # M: VMEM-resident
            ],
            out_specs=pl.BlockSpec((tm, V), lambda i: (i, 0)),
        ),
        compiler_params=pltpu.CompilerParams(
            dimension_semantics=("parallel",),
            vmem_limit_bytes=int(vmem_budget),
        ),
        cost_estimate=pl.CostEstimate(
            flops=2 * rows * F_p * V + 4 * rows * F_p,
            transcendentals=2 * rows * F_p,          # exp + log1p per element
            bytes_accessed=x_item * rows * F_p + m_bytes + out_item * rows * V,
        ),
    )(x2, m)

    return out.reshape(B, T, V)


def _reference(x, mapping):
    # Pure-JAX reference mirroring the PyTorch forward exactly.
    p = jax.nn.sigmoid(x.astype(jnp.float32))
    m = mapping.astype(jnp.float32)
    hi = jax.lax.Precision.HIGHEST
    return (
        jnp.einsum("btf,fv->btv", jnp.log(p), m, precision=hi)
        + jnp.einsum("btf,fv->btv", jnp.log(1.0 - p), 1.0 - m, precision=hi)
    )


if __name__ == "__main__":
    key = jax.random.PRNGKey(0)
    k1, k2, k3, k4 = jax.random.split(key, 4)

    cases = [
        # (B, T, F, V)
        (2, 8, 32, 48, k1, k2),       # tiny module-docstring shapes
        (4, 96, 48, 300, k3, k4),     # multi-row-tile, non-128 V, padded F
    ]

    for B, T, F, V, kx, km in cases:
        x = jax.random.normal(kx, (B, T, F), dtype=jnp.float32)
        mapping = (jax.random.uniform(km, (F, V)) > 0.5).astype(jnp.float32)
        ref = _reference(x, mapping)

        # Exact-precision path: f32 matmul.
        out_f32 = jax.block_until_ready(
            binf2ipa_mapper(x, mapping, matmul_dtype=jnp.float32))
        assert out_f32.shape == (B, T, V)
        assert jnp.allclose(out_f32, ref, atol=1e-3, rtol=1e-3), \
            f"f32 mismatch for shape {(B, T, F, V)}"

        # Default fast path: bf16 MXU (M is 0/1 -> exact; x rounded to bf16).
        out_bf16 = jax.block_until_ready(binf2ipa_mapper(x, mapping))
        assert out_bf16.shape == (B, T, V)
        assert jnp.allclose(out_bf16, ref, atol=5e-2, rtol=5e-3), \
            f"bf16 mismatch for shape {(B, T, F, V)}"

    print("KERNEL_OK")
</pallas_src>

<mosaic_0001>
module attributes {stable_mosaic.version = 11 : i64} {
  func.func @_binf2ipa_kernel(%arg0: i32, %arg1: memref<8x128xf32, #tpu.memory_space<vmem>>, %arg2: memref<128x48xf32, #tpu.memory_space<vmem>>, %arg3: memref<8x48xf32, #tpu.memory_space<vmem>>) attributes {dimension_semantics = [#tpu.dimension_semantics<parallel>], iteration_bounds = array<i64: 2>, scalar_prefetch = 0 : i64, scratch_operands = 0 : i64, tpu.core_type = #tpu.core_type<tc>, window_params = [{transform_indices = @transform_0, window_bounds = array<i64: 8, 128>}, {pipeline_mode = #tpu.pipeline_mode<synchronous>, transform_indices = @transform_1, window_bounds = array<i64: 128, 48>}, {transform_indices = @transform_2, window_bounds = array<i64: 8, 48>}]} {
    %c0 = arith.constant 0 : index
    %c0_0 = arith.constant 0 : index
    %0 = vector.load %arg1[%c0, %c0_0] : memref<8x128xf32, #tpu.memory_space<vmem>>, vector<8x128xf32>
    %cst = arith.constant 0.000000e+00 : f32
    %1 = vector.broadcast %cst : f32 to vector<8x128xf32>
    %2 = arith.maximumf %0, %1 : vector<8x128xf32>
    %3 = math.absf %0 : vector<8x128xf32>
    %cst_1 = arith.constant 0.000000e+00 : f32
    %4 = vector.broadcast %cst_1 : f32 to vector<8x128xf32>
    %5 = arith.subf %4, %3 : vector<8x128xf32>
    %6 = math.exp %5 : vector<8x128xf32>
    %7 = math.log1p %6 : vector<8x128xf32>
    %8 = arith.addf %2, %7 : vector<8x128xf32>
    %cst_2 = arith.constant dense<0.000000e+00> : vector<8xf32>
    %9 = vector.multi_reduction <add>, %8, %cst_2 [1] : vector<8x128xf32> to vector<8xf32>
    %10 = vector.shape_cast %9 : vector<8xf32> to vector<8x1xf32>
    %cst_3 = arith.constant 0.000000e+00 : f32
    %11 = vector.broadcast %cst_3 : f32 to vector<8x1xf32>
    %12 = arith.subf %11, %10 : vector<8x1xf32>
    %c0_4 = arith.constant 0 : index
    %c0_5 = arith.constant 0 : index
    %13 = vector.load %arg2[%c0_4, %c0_5] : memref<128x48xf32, #tpu.memory_space<vmem>>, vector<128x48xf32>
    %cst_6 = arith.constant dense<0.000000e+00> : vector<8x48xf32>
    %14 = tpu.matmul %0, %13, %cst_6 {dimension_numbers = #tpu.dot_dimension_numbers<[1], [0], [0], [1], [0, 0, 1, 1], [], []>} : vector<8x128xf32>, vector<128x48xf32>, vector<8x48xf32> -> vector<8x48xf32>
    %15 = vector.broadcast %12 : vector<8x1xf32> to vector<8x48xf32>
    %16 = arith.addf %14, %15 : vector<8x48xf32>
    %c0_7 = arith.constant 0 : index
    %c0_8 = arith.constant 0 : index
    %17 = vector.load %arg3[%c0_7, %c0_8] : memref<8x48xf32, #tpu.memory_space<vmem>>, vector<8x48xf32>
    tpu.vector_store %arg3[%c0_7, %c0_8], %16 {strides = array<i32>} : memref<8x48xf32, #tpu.memory_space<vmem>>, vector<8x48xf32>,
    return
  }
  func.func @transform_0(%arg0: i32) -> (i32, i32) {
    %c0_i32 = arith.constant 0 : i32
    %c0_i32_0 = arith.constant 0 : i32
    return %arg0, %c0_i32 : i32, i32
  }
  func.func @transform_1(%arg0: i32) -> (i32, i32) {
    %c0_i32 = arith.constant 0 : i32
    %c0_i32_0 = arith.constant 0 : i32
    %c0_i32_1 = arith.constant 0 : i32
    return %c0_i32, %c0_i32_0 : i32, i32
  }
  func.func @transform_2(%arg0: i32) -> (i32, i32) {
    %c0_i32 = arith.constant 0 : i32
    %c0_i32_0 = arith.constant 0 : i32
    return %arg0, %c0_i32 : i32, i32
  }
}

</mosaic_0001>

<llo_original>
// kernel: tpu_custom_call.1
$region0: #{tpu_custom_call.1}
  #allocation0 [shape = 'u32[]', space=smem, size = 0x4, offset = 0x4, fixed_abs, tag = 'smem constant byte address 0x4 - core index']
  #allocation1 [shape = 'u32[144,128]{1,0:T(1,128)}', space=vmem, size = 0x12000, scoped, tag = 'internal scratch']
  %s0 = inlined_call_operand.vmem [shape: f32[16,128], index: 0, kind: input, shape index: {}]
  %s1 = inlined_call_operand.vmem [shape: f32[128,48], index: 1, kind: input, shape index: {}]
  %s2 = inlined_call_operand.hbm [shape: f32[16,48], index: 2, kind: output, shape index: {}]
  %s3 = sld [smem:[#allocation0]]
  $region41: #{tpu_custom_call.1} parent=0
    _
  %s5 = ssub.s32 1, %s3
  %s6 = scalar_select 0, %s5, %s3
  $region1: #{tpu_custom_call.1} parent=0
    #allocation2 [shape = 'u8[8192]{0}', space=vmem, size = 0x2000, scoped, tag = 'output window, operand 0']
    #allocation3 [shape = 's32[2]{0}', space=sflag, size = 0x8, scoped, tag = 'scoped memory for tpu_custom_call.1']
    %7 = vsyncpa [#allocation3], 0
    %s8 = scalar_lea.sflag [#allocation3], 1
    %9 = vsyncpa %s8, 0
    loop: start=0, step=1, limit=4
    $region2: #{tpu_custom_call.1} parent=1 // loop_pre_header
      _
    $region3: #{tpu_custom_call.1} parent=1 // loop_header
      %s11 = sphi 0, %s15
      %p12 = scmp.ge.s32.totalorder %s11, 4
      %s21 = sphi 0, %s23
      %s24 = sphi 0, %s21
      %s25 = sphi 0, %s24
      %s41 = sphi 0, %s25
      %s45 = sphi 0, %s45
      %s47 = sphi 0, %s45
      %s48 = sphi 0, %s47
      %s62 = sphi 0, %s48
      %s68 = sphi 0, %s70
      %s71 = sphi 0, %s68
      %s72 = sphi 0, %s71
      %s88 = sphi 0, %s72
    $region4: #{tpu_custom_call.1} parent=1 // loop_header_branch
      %14 = sbr.rel (%p12) target = $region8
    $region5: #{tpu_custom_call.1} parent=1 // loop_body
      %s16 = ssub.s32 %s11, 1
      %s17 = ssub.s32 %s11, 2
      %s18 = sadd.s32 %s11, 1
      %s19 = ssub.s32 %s11, %s18
      %p20 = scmp.eq.s32.totalorder %s19, 0
      %s22 = sadd.s32 %s21, 1
      %s23 = scalar_select %p20, %s21, %s22
      %p26 = pneg %p20
      %p27 = scmp.eq.s32.totalorder %s11, 1
      %p28 = por %p26, %p27
      %p29 = scmp.ne.s32.totalorder %s21, %s24
      %p30 = scmp.eq.s32.totalorder %s11, 0
      %p31 = por %p29, %p30
      %p32 = scmp.ne.s32.totalorder %s21, %s24
      %p33 = scmp.eq.s32.totalorder %s16, 1
      %p34 = por %p32, %p33
      %p35 = scmp.ne.s32.totalorder %s24, %s25
      %p36 = scmp.eq.s32.totalorder %s16, 0
      %p37 = por %p35, %p36
      %p38 = scmp.ne.s32.totalorder %s24, %s25
      %p39 = scmp.eq.s32.totalorder %s17, 1
      %p40 = por %p38, %p39
      %p42 = scmp.ne.s32.totalorder %s25, %s41
      %p43 = scmp.eq.s32.totalorder %s17, 0
      %p44 = por %p42, %p43
      %s46 = sadd.s32 %s45, 1
      %p49 = scmp.eq.s32.totalorder %s11, 1
      %p50 = scmp.ne.s32.totalorder %s45, %s47
      %p51 = scmp.eq.s32.totalorder %s11, 0
      %p52 = por %p50, %p51
      %p53 = scmp.ne.s32.totalorder %s45, %s47
      %p54 = scmp.eq.s32.totalorder %s16, 1
      %p55 = por %p53, %p54
      %p56 = scmp.ne.s32.totalorder %s47, %s48
      %p57 = scmp.eq.s32.totalorder %s16, 0
      %p58 = por %p56, %p57
      %p59 = scmp.ne.s32.totalorder %s47, %s48
      %p60 = scmp.eq.s32.totalorder %s17, 1
      %p61 = por %p59, %p60
      %p63 = scmp.ne.s32.totalorder %s48, %s62
      %p64 = scmp.eq.s32.totalorder %s17, 0
      %p65 = por %p63, %p64
      %s66 = ssub.s32 %s11, %s18
      %p67 = scmp.eq.s32.totalorder %s66, 0
      %s69 = sadd.s32 %s68, 1
      %s70 = scalar_select %p67, %s68, %s69
      %p73 = pneg %p67
      %p74 = scmp.eq.s32.totalorder %s11, 1
      %p75 = por %p73, %p74
      %p76 = scmp.ne.s32.totalorder %s68, %s71
      %p77 = scmp.eq.s32.totalorder %s11, 0
      %p78 = por %p76, %p77
      %p79 = scmp.ne.s32.totalorder %s68, %s71
      %p80 = scmp.eq.s32.totalorder %s16, 1
      %p81 = por %p79, %p80
      %p82 = scmp.ne.s32.totalorder %s71, %s72
      %p83 = scmp.eq.s32.totalorder %s16, 0
      %p84 = por %p82, %p83
      %p85 = scmp.ne.s32.totalorder %s71, %s72
      %p86 = scmp.eq.s32.totalorder %s17, 1
      %p87 = por %p85, %p86
      %p89 = scmp.ne.s32.totalorder %s72, %s88
      %p90 = scmp.eq.s32.totalorder %s17, 0
      %p91 = por %p89, %p90
      %p92 = scmp.le.s32.totalorder 1, %s11
      %p93 = scmp.lt.s32.totalorder %s11, 3
      %p94 = pnand %p92, %p93
      %p95 = pneg %p94
      // Predicated region
      $region9: #{tpu_custom_call.1} parent=5 // pred_check
        _
      $region10: #{tpu_custom_call.1} parent=5 // pred_check_branch
        %97 = sbr.rel (%p94) target = $region12
      $region11: #{tpu_custom_call.1} parent=5 // pred_region
        %s98 = ssub.s32 %s11, 1
        // Predicated region
        $region13: #{tpu_custom_call.1} parent=11 // pred_check
          %p99 = pneg %p58
        $region14: #{tpu_custom_call.1} parent=11 // pred_check_branch
          %101 = sbr.rel (%p99) target = $region16
        $region15: #{tpu_custom_call.1} parent=11 // pred_region
          _
        $region16: #{tpu_custom_call.1} parent=11 // pred_fallthru
          _
      $region12: #{tpu_custom_call.1} parent=5 // pred_fallthru
        _
      %p102 = scmp.lt.s32.totalorder %s11, 2
      // Predicated region
      $region17: #{tpu_custom_call.1} parent=5 // pred_check
        %p103 = pneg %p102
      $region18: #{tpu_custom_call.1} parent=5 // pred_check_branch
        %105 = sbr.rel (%p103) target = $region20
      $region19: #{tpu_custom_call.1} parent=5 // pred_region
        // Predicated region
        $region21: #{tpu_custom_call.1} parent=19 // pred_check
          %p106 = pneg %p31
        $region22: #{tpu_custom_call.1} parent=19 // pred_check_branch
          %108 = sbr.rel (%p106) target = $region24
        $region23: #{tpu_custom_call.1} parent=19 // pred_region
          %p109 = scmp.lt.s32.totalorder %s11, 1
          %s110 = scalar_select %p109, %s11, 1
          %s111 = smul.addr %s110, 8
          %s112 = scalar_lea.vmem %s0, %s111
        $region24: #{tpu_custom_call.1} parent=19 // pred_fallthru
          _
      $region20: #{tpu_custom_call.1} parent=5 // pred_fallthru
        _
      %p113 = scmp.le.s32.totalorder 1, %s11
      %p114 = scmp.lt.s32.totalorder %s11, 3
      %p115 = pnand %p113, %p114
      %p116 = pneg %p115
      // Predicated region
      $region25: #{tpu_custom_call.1} parent=5 // pred_check
        _
      $region26: #{tpu_custom_call.1} parent=5 // pred_check_branch
        %118 = sbr.rel (%p115) target = $region28
      $region27: #{tpu_custom_call.1} parent=5 // pred_region
        %s119 = ssub.s32 %s11, 1
        %p120 = scmp.lt.s32.totalorder %s16, 1
        %s121 = scalar_select %p120, %s16, 1
        %s122 = smul.addr %s121, 8
        %s123 = scalar_lea.vmem %s0, %s122
        %p124 = pneg %p37
        %p125 = pneg %p34
        %p126 = pneg %p58
        %p127 = pneg %p55
        %p128 = pneg %p84
        %p129 = pneg %p81
        %s130 = sand.u32 %s71, 1
        %s131 = scalar_lea.sflag [#allocation3], %s130
        %s132 = sand.u32 %s71, 1
        %s133 = smul.addr %s132, 8
        %s134 = scalar_lea.vmem [#allocation2], %s133
        %p135 = scmp.lt.s32.totalorder %s16, 1
        %s136 = scalar_select %p135, %s16, 1
        %s137 = smul.addr %s136, 8
        %s138 = scalar_lea.vmem %s0, %s137
        %v139 = vld [vmem:[%s138] sm:$0xff]
        %v140 = vmax.f32 %v139, 0.0
        %v141 = vand.u32 2147483647, %v139
        %v142 = vsub.f32 0.0, %v141
        %v143 = vmul.f32 %v142, 1.442695
        %v144 = vpow.pop %v143
        %v145 = vadd.f32 %v144, 1.0
        %v146 = vlog2.pop %v145
        %v147 = vmul.f32 %v146, 0.6931472
        %v148 = vmul.f32 -0.5, %v144
        %v149 = vadd.f32 %v148, 1.0
        %v150 = vmul.f32 %v149, %v144
        %v151 = vand.u32 2147483647, %v144
        %vm152 = vcmp.lt.f32.partialorder %v151, 0.0004427343
        %v153 = vsel %vm152, %v150, %v147
        %v154 = vadd.f32 %v140, %v153
        %155 = vadd.xlane.f32.xlu0 %v154
        %v156 = vpop.xlane.xlu0 %155
        %v157 = vsub.f32 0.0, %v156
        %v158 = vld [vmem:[%s1] sm:$0xff]
        %v159 = vld [vmem:[%s1 + $0x8] sm:$0xff]
        %v160 = vld [vmem:[%s1 + $0x10] sm:$0xff]
        %v161 = vld [vmem:[%s1 + $0x18] sm:$0xff]
        %v162 = vld [vmem:[%s1 + $0x20] sm:$0xff]
        %v163 = vld [vmem:[%s1 + $0x28] sm:$0xff]
        %v164 = vld [vmem:[%s1 + $0x30] sm:$0xff]
        %v165 = vld [vmem:[%s1 + $0x38] sm:$0xff]
        %v166 = vld [vmem:[%s1 + $0x40] sm:$0xff]
        %v167 = vld [vmem:[%s1 + $0x48] sm:$0xff]
        %v168 = vld [vmem:[%s1 + $0x50] sm:$0xff]
        %v169 = vld [vmem:[%s1 + $0x58] sm:$0xff]
        %v170 = vld [vmem:[%s1 + $0x60] sm:$0xff]
        %v171 = vld [vmem:[%s1 + $0x68] sm:$0xff]
        %v172 = vld [vmem:[%s1 + $0x70] sm:$0xff]
        %v173 = vld [vmem:[%s1 + $0x78] sm:$0xff]
        %174 = vmatprep.subr.mxu0 0.0
        %175 = vmatpush1.msra.mxu0 %v158
        %176 = vmatprep.subr.mxu0 0.0
        %177 = vmatpush1.msra.mxu0 %v159
        %178 = vmatprep.subr.mxu0 0.0
        %179 = vmatpush1.msra.mxu0 %v160
        %180 = vmatprep.subr.mxu0 0.0
        %181 = vmatpush1.msra.mxu0 %v161
        %182 = vmatprep.subr.mxu0 0.0
        %183 = vmatpush1.msra.mxu0 %v162
        %184 = vmatprep.subr.mxu0 0.0
        %185 = vmatpush1.msra.mxu0 %v163
        %186 = vmatprep.subr.mxu0 0.0
        %187 = vmatpush1.msra.mxu0 %v164
        %188 = vmatprep.subr.mxu0 0.0
        %189 = vmatpush1.msra.mxu0 %v165
        %190 = vmatprep.subr.mxu0 0.0
        %191 = vmatpush1.msra.mxu0 %v166
        %192 = vmatprep.subr.mxu0 0.0
        %193 = vmatpush1.msra.mxu0 %v167
        %194 = vmatprep.subr.mxu0 0.0
        %195 = vmatpush1.msra.mxu0 %v168
        %196 = vmatprep.subr.mxu0 0.0
        %197 = vmatpush1.msra.mxu0 %v169
        %198 = vmatprep.subr.mxu0 0.0
        %199 = vmatpush1.msra.mxu0 %v170
        %200 = vmatprep.subr.mxu0 0.0
        %201 = vmatpush1.msra.mxu0 %v171
        %202 = vmatprep.subr.mxu0 0.0
        %203 = vmatpush1.msra.mxu0 %v172
        %204 = vmatprep.subr.mxu0 0.0
        %205 = vmatpush1.msra.mxu0 %v173
        %206 = vmatprep.subr.mxu0 0.0
        %207 = vmatpush1.msra.mxu0 0.0
        %208 = vmatprep.subr.mxu0 0.0
        %209 = vmatpush1.msra.mxu0 0.0
        %210 = vmatprep.subr.mxu0 0.0
        %211 = vmatpush1.msra.mxu0 0.0
        %212 = vmatprep.subr.mxu0 0.0
        %213 = vmatpush1.msra.mxu0 0.0
        %214 = vmatprep.subr.mxu0 0.0
        %215 = vmatpush1.msra.mxu0 0.0
        %216 = vmatprep.subr.mxu0 0.0
        %217 = vmatpush1.msra.mxu0 0.0
        %218 = vmatprep.subr.mxu0 0.0
        %219 = vmatpush1.msra.mxu0 0.0
        %220 = vmatprep.subr.mxu0 0.0
        %221 = vmatpush1.msra.mxu0 0.0
        %222 = vmatprep.subr.mxu0 0.0
        %223 = vmatpush1.msra.mxu0 0.0
        %224 = vmatprep.subr.mxu0 0.0
        %225 = vmatpush1.msra.mxu0 0.0
        %226 = vmatprep.subr.mxu0 0.0
        %227 = vmatpush1.msra.mxu0 0.0
        %228 = vmatprep.subr.mxu0 0.0
        %229 = vmatpush1.msra.mxu0 0.0
        %230 = vmatprep.subr.mxu0 0.0
        %231 = vmatpush1.msra.mxu0 0.0
        %232 = vmatprep.subr.mxu0 0.0
        %233 = vmatpush1.msra.mxu0 0.0
        %234 = vmatprep.subr.mxu0 0.0
        %235 = vmatpush1.msra.mxu0 0.0
        %236 = vmatprep.subr.mxu0 0.0
        %237 = vmatpush1.msra.mxu0 0.0
        %238 = vmatprep.mubr.f32.mxu0 0.0
        %239 = vmatmul.mubr.f32.gmra.mrb[0].mxu0 %v139
        %v240 = vpop.f32.mrb[0].mxu0
        %v241 = vadd.f32 %v157, %v240
        %v242 = vpop.f32.mrb[0].mxu0
        %243 = vdwg.mxu0
        %vm244 = vcmask 392192
        %245 = vst.msk [vmem:[%s134] sm:$0xff] %vm244, %v241
        %s246 = sand.u32 %s71, 1
        %s247 = scalar_lea.sflag [#allocation3], %s246
        %s248 = sand.u32 %s71, 1
        %s249 = smul.addr %s248, 8
        %s250 = scalar_lea.vmem [#allocation2], %s249
        // Predicated region
        $region29: #{tpu_custom_call.1} parent=27 // pred_check
          %p251 = pneg %p81
        $region30: #{tpu_custom_call.1} parent=27 // pred_check_branch
          %253 = sbr.rel (%p251) target = $region32
        $region31: #{tpu_custom_call.1} parent=27 // pred_region
          %s255 = ssub.s32 128, 128
          %256 = vsyncadd %s247, %s255
          %s257 = smul.addr %s16, 128
          %s258 = scalar_lea.hbm %s2, %s257
          %s260 = sshll.u32 %s250, 4
          %s261 = int_to_ptr.vmem [resolvable:$true] %s260
          %263 = dma.vmem_to_hbm [thread:$0]  %s261, 128, %s258, %s247
        $region32: #{tpu_custom_call.1} parent=27 // pred_fallthru
          _
      $region28: #{tpu_custom_call.1} parent=5 // pred_fallthru
        _
      %p264 = scmp.le.s32.totalorder 2, %s11
      // Predicated region
      $region33: #{tpu_custom_call.1} parent=5 // pred_check
        %p265 = pneg %p264
      $region34: #{tpu_custom_call.1} parent=5 // pred_check_branch
        %267 = sbr.rel (%p265) target = $region36
      $region35: #{tpu_custom_call.1} parent=5 // pred_region
        %s268 = ssub.s32 %s11, 2
        // Predicated region
        $region37: #{tpu_custom_call.1} parent=35 // pred_check
          %p269 = pneg %p87
        $region38: #{tpu_custom_call.1} parent=35 // pred_check_branch
          %271 = sbr.rel (%p269) target = $region40
        $region39: #{tpu_custom_call.1} parent=35 // pred_region
          %s272 = sand.u32 %s72, 1
          %s273 = scalar_lea.sflag [#allocation3], %s272
          %s274 = sand.u32 %s72, 1
          %s275 = smul.addr %s274, 8
          %s276 = scalar_lea.vmem [#allocation2], %s275
          %277 = dma.done %s273, 128
        $region40: #{tpu_custom_call.1} parent=35 // pred_fallthru
          _
      $region36: #{tpu_custom_call.1} parent=5 // pred_fallthru
        _
    $region6: #{tpu_custom_call.1} parent=1 // loop_footer
      %s15 = sadd.s32 1, %s11
    $region7: #{tpu_custom_call.1} parent=1 // loop_footer_branch
      %10 = sbr.rel target = $region3
    $region8: #{tpu_custom_call.1} parent=1 // loop_exit
      _
    %278 = vsyncpa [#allocation3], 1
    %s279 = scalar_lea.sflag [#allocation3], 1
    %280 = vsyncpa %s279, 1

</llo_original>
